<compile_context>
chip_gen: v5e
topology: v5e:2x2
jax: 0.10.0
libtpu: 0.0.40
codegen_flags: <defaults>
</compile_context>

<pallas_src>
import math
import numpy as np
import jax
import jax.numpy as jnp
from jax.experimental import pallas as pl
from jax.experimental.pallas import tpu as pltpu

# ----------------------------- configuration --------------------------------
HIDDEN = 32          # hidden_size
NUM_HEADS = 4        # num_attention_heads
HEAD_DIM = HIDDEN // NUM_HEADS
SEQ = 8
BATCH = 2
GROUPS = BATCH * NUM_HEADS
MLP_RATIO = 4
MULTIPLE_OF = 256
EPS = 1e-6
ROPE_BASE = 10000
SCALE = 1.0 / math.sqrt(HEAD_DIM)

# SwiGLU hidden size (InternEvo FeedForward rounds up to multiple_of)
FFN_HIDDEN = MULTIPLE_OF * ((int(HIDDEN * MLP_RATIO) + MULTIPLE_OF - 1) // MULTIPLE_OF)

# Packed attention-weight column layout (each block is HIDDEN wide):
#   [ Wq | Wq_rot | Wk | Wk_rot | Wv | Wout ]    -> (HIDDEN, 6*HIDDEN) bf16
_QKV_COLS = 5 * HIDDEN          # 160
_AUX_COLS = 2 * HIDDEN + SEQ    # 72   ([cos2d | sin2d | causal-bias(padded)])


# ---------------------------- layout helpers ---------------------------------
def _split_heads(t2d):
    """(B*S, NH*HD) -> (B*NH, S, HD) via static lane slices + leading-dim concat."""
    parts = [
        t2d[:, h * HEAD_DIM:(h + 1) * HEAD_DIM].reshape(BATCH, 1, SEQ, HEAD_DIM)
        for h in range(NUM_HEADS)
    ]
    return jnp.concatenate(parts, axis=1).reshape(GROUPS, SEQ, HEAD_DIM)


def _merge_heads(t3d):
    """(B*NH, S, HD) -> (B*S, NH*HD)."""
    t4 = t3d.reshape(BATCH, NUM_HEADS, SEQ, HEAD_DIM)
    parts = [t4[:, h].reshape(BATCH * SEQ, HEAD_DIM) for h in range(NUM_HEADS)]
    return jnp.concatenate(parts, axis=1)


# ------------------------------- kernel --------------------------------------
def decoder_kernel(x_ref, wattn_ref, aux_ref, w13_ref, w2_ref, o_ref):
    x2 = x_ref[...]                                     # (B*S, H) f32
    w_attn = wattn_ref[...]                             # (H, 6H)  bf16
    aux = aux_ref[...]                                  # (B*S, 2H+S) f32
    cos2d = aux[:, :HIDDEN]                             # (B*S, H)
    sin2d = aux[:, HIDDEN:2 * HIDDEN]
    mask_bias = aux[:SEQ, 2 * HIDDEN:2 * HIDDEN + SEQ]  # (S, S): 0 / -1e30

    # --- attention RMSNorm (gain folded into the packed weight rows) ---
    var = jnp.mean(x2 * x2, axis=-1, keepdims=True)
    hn = (x2 * jax.lax.rsqrt(var + EPS)).astype(jnp.bfloat16)

    # --- single lane-dense QKV(+rotated-half) projection: (16,32)@(32,160) ---
    # QKV bias is identically zero (module zeroes 1-D attention params) -> omitted.
    qkv = jnp.dot(hn, w_attn[:, :_QKV_COLS],
                  preferred_element_type=jnp.float32)   # (B*S, 5H) f32
    q_pre = qkv[:, 0 * HIDDEN:1 * HIDDEN]
    q_rot = qkv[:, 1 * HIDDEN:2 * HIDDEN]
    k_pre = qkv[:, 2 * HIDDEN:3 * HIDDEN]
    k_rot = qkv[:, 3 * HIDDEN:4 * HIDDEN]
    v2d = qkv[:, 4 * HIDDEN:5 * HIDDEN]

    # --- RoPE as two FMAs (rotate-half baked into the *_rot weight columns) ---
    q2d = q_pre * cos2d + q_rot * sin2d                 # softmax scale already in Wq
    k2d = k_pre * cos2d + k_rot * sin2d

    # --- batched causal attention over g = (batch, head), bf16 MXU operands ---
    q3 = _split_heads(q2d).astype(jnp.bfloat16)         # (G, S, hd)
    k3 = _split_heads(k2d).astype(jnp.bfloat16)
    v3 = _split_heads(v2d).astype(jnp.bfloat16)

    s = jnp.einsum('gqd,gkd->gqk', q3, k3,
                   preferred_element_type=jnp.float32)  # (G, S, S) f32
    s = s + mask_bias[None]                             # additive causal bias
    s = s - jnp.max(s, axis=-1, keepdims=True)
    p = jnp.exp(s)
    p = p * pl.reciprocal(jnp.sum(p, axis=-1, keepdims=True), approx=True)
    ctx = jnp.einsum('gqk,gkd->gqd', p.astype(jnp.bfloat16), v3,
                     preferred_element_type=jnp.float32)  # (G, S, hd) f32

    # --- single lane-dense output projection: (16,32)@(32,32) ---
    ctx2d = _merge_heads(ctx).astype(jnp.bfloat16)      # (B*S, H)
    attn = jnp.dot(ctx2d, w_attn[:, _QKV_COLS:_QKV_COLS + HIDDEN],
                   preferred_element_type=jnp.float32)  # (B*S, H) f32
    res2 = attn + x2

    # --- ffn RMSNorm (gain folded into w13 rows) + fused SwiGLU MLP ---
    var2 = jnp.mean(res2 * res2, axis=-1, keepdims=True)
    hn2 = (res2 * jax.lax.rsqrt(var2 + EPS)).astype(jnp.bfloat16)
    gu = jnp.dot(hn2, w13_ref[...],
                 preferred_element_type=jnp.float32).astype(jnp.bfloat16)  # (B*S, 2F)
    g = gu[:, :FFN_HIDDEN]
    u = gu[:, FFN_HIDDEN:]
    act = (g * jax.nn.sigmoid(g)) * u                   # bf16 gate math
    ff = jnp.dot(act, w2_ref[...], preferred_element_type=jnp.float32)     # (B*S, H)

    o_ref[...] = ff + res2


# ------------------------------- wrapper --------------------------------------
def baichuan2_decoder(x, kp):
    B, S, H = x.shape
    x2 = x.reshape(B * S, H)                            # flat I/O; reshape is free in XLA
    vmem = pl.BlockSpec(memory_space=pltpu.MemorySpace.VMEM)
    out2 = pl.pallas_call(
        decoder_kernel,
        out_shape=jax.ShapeDtypeStruct((B * S, H), jnp.float32),
        in_specs=[vmem] * 5,
        out_specs=vmem,
    )(x2, kp["wattn"], kp["aux"], kp["w13"], kp["w2"])
    # TODO(synk): at real Baichuan2 sizes, grid/tile the FFN (and batch over
    # TensorCores on v7x) instead of whole-array VMEM residency.
    return out2.reshape(B, S, H)


# --------------------------- parameter init -----------------------------------
def init_params(key):
    # Mirrors Baichuan2Decoder.reset_parameters (normal init, scaled init for
    # the "other" projections, 1-D params zeroed).
    layer_idx = 0
    attn_wqkv_std = 0.006
    attn_other_std = 0.0015 / math.sqrt(2.0 * (layer_idx + 1))   # scaled init
    ffn_up_std = 0.006
    ffn_other_std = 0.0015 / math.sqrt(2.0 * (layer_idx + 1))    # scaled init (w2)

    ks = jax.random.split(key, 6)
    wqkv = jax.random.normal(ks[0], (3 * HIDDEN, HIDDEN), jnp.float32) * attn_wqkv_std
    wout = jax.random.normal(ks[1], (HIDDEN, HIDDEN), jnp.float32) * attn_other_std
    w1 = jax.random.normal(ks[2], (FFN_HIDDEN, HIDDEN), jnp.float32) * ffn_up_std
    w3 = jax.random.normal(ks[3], (FFN_HIDDEN, HIDDEN), jnp.float32) * ffn_up_std
    w2 = jax.random.normal(ks[4], (HIDDEN, FFN_HIDDEN), jnp.float32) * ffn_other_std
    bqkv = jnp.zeros((3 * HIDDEN,), jnp.float32)                 # biases zeroed
    attn_norm_w = jnp.ones((HIDDEN,), jnp.float32)               # RMSNorm weight = 1
    ffn_norm_w = jnp.ones((HIDDEN,), jnp.float32)

    # Rotary tables (rotary_emb_dim == head_dim, scale_base=0 => no scaling)
    inv_freq = 1.0 / (ROPE_BASE ** (jnp.arange(0, HEAD_DIM, 2, dtype=jnp.float32) / HEAD_DIM))
    t = jnp.arange(SEQ, dtype=jnp.float32)
    freqs = jnp.outer(t, inv_freq)                               # (S, hd/2)
    cos, sin = jnp.cos(freqs), jnp.sin(freqs)

    # ------- reference (un-folded, f32, PyTorch-equivalent) params -------
    ref_params = {
        "attn_norm_w": attn_norm_w, "ffn_norm_w": ffn_norm_w,
        "wqkv_t": wqkv.T, "bqkv": bqkv, "wout_t": wout.T,
        "w1_t": w1.T, "w3_t": w3.T, "w2_t": w2.T,
        "cos": cos, "sin": sin,
    }

    # ------- kernel params: host-side folds + packed layouts + bf16 -------
    gain = attn_norm_w[:, None]                                  # attn-norm fold (rows)
    wqkv_t = wqkv.T                                              # (H, 3H), cols = (3, nh, hd)
    wq_t = wqkv_t[:, :HIDDEN]
    wk_t = wqkv_t[:, HIDDEN:2 * HIDDEN]
    wv_t = wqkv_t[:, 2 * HIDDEN:]

    def rot_cols(w):
        # rotate_half(x @ W) == x @ rot_cols(W): per-head column swap + sign.
        w3d = w.reshape(HIDDEN, NUM_HEADS, HEAD_DIM)
        w_rot = jnp.concatenate([-w3d[..., HEAD_DIM // 2:], w3d[..., :HEAD_DIM // 2]], axis=-1)
        return w_rot.reshape(HIDDEN, HIDDEN)

    wattn = jnp.concatenate([
        wq_t * gain * SCALE,             # Q       (softmax scale folded)
        rot_cols(wq_t) * gain * SCALE,   # rotate_half(Q)
        wk_t * gain,                     # K
        rot_cols(wk_t) * gain,           # rotate_half(K)
        wv_t * gain,                     # V
        wout.T,                          # output projection
    ], axis=1).astype(jnp.bfloat16)                              # (H, 6H)

    # Full-width cos/sin tables in the flat (B*S, H) activation layout.
    cos_full = jnp.concatenate([cos, cos], axis=-1)              # (S, hd)
    sin_full = jnp.concatenate([sin, sin], axis=-1)
    cos2d = jnp.tile(cos_full, (BATCH, NUM_HEADS))               # (B*S, H)
    sin2d = jnp.tile(sin_full, (BATCH, NUM_HEADS))
    causal = jnp.where(jnp.tril(jnp.ones((SEQ, SEQ), bool)),
                       0.0, -1e30).astype(jnp.float32)           # (S, S)
    causal_pad = jnp.concatenate(
        [causal, jnp.zeros((BATCH * SEQ - SEQ, SEQ), jnp.float32)], axis=0)
    aux = jnp.concatenate([cos2d, sin2d, causal_pad], axis=1)    # (B*S, 2H+S) f32

    # Fuse w1/w3 into one up-projection, fold ffn RMSNorm gain into its rows.
    w13 = (jnp.concatenate([w1.T, w3.T], axis=1)
           * ffn_norm_w[:, None]).astype(jnp.bfloat16)           # (H, 2F)

    kernel_params = {
        "wattn": wattn,                                          # (H, 6H)  bf16
        "aux": aux,                                              # (B*S, 2H+S) f32
        "w13": w13,                                              # (H, 2F)  bf16
        "w2": w2.T.astype(jnp.bfloat16),                         # (F, H)   bf16
    }
    return kernel_params, ref_params


# --------------------------- pure-JAX reference --------------------------------
def reference(x, p):
    def rms(v, w):
        return v * jax.lax.rsqrt(jnp.mean(v * v, -1, keepdims=True) + EPS) * w

    res1 = x
    hn = rms(res1, p["attn_norm_w"])
    qkv = hn @ p["wqkv_t"] + p["bqkv"]                           # (B,S,3H)
    B, S, _ = x.shape
    qkv = qkv.reshape(B, S, 3, NUM_HEADS, HEAD_DIM)
    q, k, v = qkv[:, :, 0], qkv[:, :, 1], qkv[:, :, 2]           # (B,S,nh,hd)

    cos = p["cos"][None, :, None, :]
    sin = p["sin"][None, :, None, :]

    def rope(t):
        t1, t2 = t[..., : HEAD_DIM // 2], t[..., HEAD_DIM // 2:]
        return jnp.concatenate([t1 * cos - t2 * sin, t1 * sin + t2 * cos], -1)

    q, k = rope(q), rope(k)
    s = jnp.einsum("bqhd,bkhd->bhqk", q, k) * SCALE
    mask = jnp.tril(jnp.ones((S, S), bool))
    s = jnp.where(mask[None, None], s, -1e30)
    pattn = jax.nn.softmax(s, axis=-1)
    ctx = jnp.einsum("bhqk,bkhd->bqhd", pattn, v).reshape(B, S, HIDDEN)
    attn_out = ctx @ p["wout_t"]
    res2 = attn_out + res1

    hn2 = rms(res2, p["ffn_norm_w"])
    g = hn2 @ p["w1_t"]
    u = hn2 @ p["w3_t"]
    ff = ((g * jax.nn.sigmoid(g)) * u) @ p["w2_t"]
    return ff + res2


# ----------------------------------- main ---------------------------------------
if __name__ == "__main__":
    key = jax.random.PRNGKey(0)
    k_x, k_p = jax.random.split(key)
    x = jax.random.normal(k_x, (BATCH, SEQ, HIDDEN), jnp.float32)
    kernel_params, ref_params = init_params(k_p)

    out = jax.block_until_ready(baichuan2_decoder(x, kernel_params))
    ref = jax.block_until_ready(reference(x, ref_params))
    np.testing.assert_allclose(np.asarray(out), np.asarray(ref), rtol=2e-2, atol=2e-2)

    print("KERNEL_OK")
</pallas_src>

<mosaic_0001>
module attributes {stable_mosaic.version = 11 : i64} {
  func.func @decoder_kernel(%arg0: memref<16x32xf32, #tpu.memory_space<vmem>>, %arg1: memref<32x192xbf16, #tpu.memory_space<vmem>>, %arg2: memref<16x72xf32, #tpu.memory_space<vmem>>, %arg3: memref<32x512xbf16, #tpu.memory_space<vmem>>, %arg4: memref<256x32xbf16, #tpu.memory_space<vmem>>, %arg5: memref<16x32xf32, #tpu.memory_space<vmem>>) attributes {dimension_semantics = [], scalar_prefetch = 0 : i64, scratch_operands = 0 : i64, tpu.core_type = #tpu.core_type<tc>} {
    %c0 = arith.constant 0 : index
    %c0_0 = arith.constant 0 : index
    %0 = vector.load %arg0[%c0, %c0_0] : memref<16x32xf32, #tpu.memory_space<vmem>>, vector<16x32xf32>
    %c0_1 = arith.constant 0 : index
    %c0_2 = arith.constant 0 : index
    %1 = vector.load %arg1[%c0_1, %c0_2] : memref<32x192xbf16, #tpu.memory_space<vmem>>, vector<32x192xbf16>
    %c0_3 = arith.constant 0 : index
    %c0_4 = arith.constant 0 : index
    %2 = vector.load %arg2[%c0_3, %c0_4] : memref<16x72xf32, #tpu.memory_space<vmem>>, vector<16x72xf32>
    %3 = vector.extract_strided_slice %2 {offsets = [0, 0], sizes = [16, 32], strides = [1, 1]} : vector<16x72xf32> to vector<16x32xf32>
    %4 = vector.extract_strided_slice %2 {offsets = [0, 32], sizes = [16, 32], strides = [1, 1]} : vector<16x72xf32> to vector<16x32xf32>
    %5 = vector.extract_strided_slice %2 {offsets = [0, 64], sizes = [8, 8], strides = [1, 1]} : vector<16x72xf32> to vector<8x8xf32>
    %6 = arith.mulf %0, %0 : vector<16x32xf32>
    %cst = arith.constant dense<0.000000e+00> : vector<16xf32>
    %7 = vector.multi_reduction <add>, %6, %cst [1] : vector<16x32xf32> to vector<16xf32>
    %8 = vector.shape_cast %7 : vector<16xf32> to vector<16x1xf32>
    %cst_5 = arith.constant 3.200000e+01 : f32
    %9 = vector.broadcast %cst_5 : f32 to vector<16x1xf32>
    %10 = arith.divf %8, %9 : vector<16x1xf32>
    %cst_6 = arith.constant 9.99999997E-7 : f32
    %11 = vector.broadcast %cst_6 : f32 to vector<16x1xf32>
    %12 = arith.addf %10, %11 : vector<16x1xf32>
    %13 = math.rsqrt %12 : vector<16x1xf32>
    %14 = vector.broadcast %13 : vector<16x1xf32> to vector<16x32xf32>
    %15 = arith.mulf %0, %14 : vector<16x32xf32>
    %16 = arith.truncf %15 : vector<16x32xf32> to vector<16x32xbf16>
    %17 = vector.extract_strided_slice %1 {offsets = [0, 0], sizes = [32, 160], strides = [1, 1]} : vector<32x192xbf16> to vector<32x160xbf16>
    %cst_7 = arith.constant dense<0.000000e+00> : vector<16x160xf32>
    %18 = tpu.matmul %16, %17, %cst_7 {dimension_numbers = #tpu.dot_dimension_numbers<[1], [0], [0], [1], [0, 0, 1, 1], [], []>} : vector<16x32xbf16>, vector<32x160xbf16>, vector<16x160xf32> -> vector<16x160xf32>
    %19 = vector.extract_strided_slice %18 {offsets = [0, 0], sizes = [16, 32], strides = [1, 1]} : vector<16x160xf32> to vector<16x32xf32>
    %20 = vector.extract_strided_slice %18 {offsets = [0, 32], sizes = [16, 32], strides = [1, 1]} : vector<16x160xf32> to vector<16x32xf32>
    %21 = vector.extract_strided_slice %18 {offsets = [0, 64], sizes = [16, 32], strides = [1, 1]} : vector<16x160xf32> to vector<16x32xf32>
    %22 = vector.extract_strided_slice %18 {offsets = [0, 96], sizes = [16, 32], strides = [1, 1]} : vector<16x160xf32> to vector<16x32xf32>
    %23 = vector.extract_strided_slice %18 {offsets = [0, 128], sizes = [16, 32], strides = [1, 1]} : vector<16x160xf32> to vector<16x32xf32>
    %24 = arith.mulf %19, %3 : vector<16x32xf32>
    %25 = arith.mulf %20, %4 : vector<16x32xf32>
    %26 = arith.addf %24, %25 : vector<16x32xf32>
    %27 = arith.mulf %21, %3 : vector<16x32xf32>
    %28 = arith.mulf %22, %4 : vector<16x32xf32>
    %29 = arith.addf %27, %28 : vector<16x32xf32>
    %30 = vector.extract_strided_slice %26 {offsets = [0, 0], sizes = [16, 8], strides = [1, 1]} : vector<16x32xf32> to vector<16x8xf32>
    %31 = vector.shape_cast %30 : vector<16x8xf32> to vector<2x1x8x8xf32>
    %32 = vector.extract_strided_slice %26 {offsets = [0, 8], sizes = [16, 8], strides = [1, 1]} : vector<16x32xf32> to vector<16x8xf32>
    %33 = vector.shape_cast %32 : vector<16x8xf32> to vector<2x1x8x8xf32>
    %34 = vector.extract_strided_slice %26 {offsets = [0, 16], sizes = [16, 8], strides = [1, 1]} : vector<16x32xf32> to vector<16x8xf32>
    %35 = vector.shape_cast %34 : vector<16x8xf32> to vector<2x1x8x8xf32>
    %36 = vector.extract_strided_slice %26 {offsets = [0, 24], sizes = [16, 8], strides = [1, 1]} : vector<16x32xf32> to vector<16x8xf32>
    %37 = vector.shape_cast %36 : vector<16x8xf32> to vector<2x1x8x8xf32>
    %38 = tpu.concatenate %31, %33, %35, %37 in 1 : vector<2x1x8x8xf32>, vector<2x1x8x8xf32>, vector<2x1x8x8xf32>, vector<2x1x8x8xf32> -> vector<2x4x8x8xf32>
    %39 = vector.shape_cast %38 : vector<2x4x8x8xf32> to vector<8x8x8xf32>
    %40 = arith.truncf %39 : vector<8x8x8xf32> to vector<8x8x8xbf16>
    %41 = vector.extract_strided_slice %29 {offsets = [0, 0], sizes = [16, 8], strides = [1, 1]} : vector<16x32xf32> to vector<16x8xf32>
    %42 = vector.shape_cast %41 : vector<16x8xf32> to vector<2x1x8x8xf32>
    %43 = vector.extract_strided_slice %29 {offsets = [0, 8], sizes = [16, 8], strides = [1, 1]} : vector<16x32xf32> to vector<16x8xf32>
    %44 = vector.shape_cast %43 : vector<16x8xf32> to vector<2x1x8x8xf32>
    %45 = vector.extract_strided_slice %29 {offsets = [0, 16], sizes = [16, 8], strides = [1, 1]} : vector<16x32xf32> to vector<16x8xf32>
    %46 = vector.shape_cast %45 : vector<16x8xf32> to vector<2x1x8x8xf32>
    %47 = vector.extract_strided_slice %29 {offsets = [0, 24], sizes = [16, 8], strides = [1, 1]} : vector<16x32xf32> to vector<16x8xf32>
    %48 = vector.shape_cast %47 : vector<16x8xf32> to vector<2x1x8x8xf32>
    %49 = tpu.concatenate %42, %44, %46, %48 in 1 : vector<2x1x8x8xf32>, vector<2x1x8x8xf32>, vector<2x1x8x8xf32>, vector<2x1x8x8xf32> -> vector<2x4x8x8xf32>
    %50 = vector.shape_cast %49 : vector<2x4x8x8xf32> to vector<8x8x8xf32>
    %51 = arith.truncf %50 : vector<8x8x8xf32> to vector<8x8x8xbf16>
    %52 = vector.extract_strided_slice %23 {offsets = [0, 0], sizes = [16, 8], strides = [1, 1]} : vector<16x32xf32> to vector<16x8xf32>
    %53 = vector.shape_cast %52 : vector<16x8xf32> to vector<2x1x8x8xf32>
    %54 = vector.extract_strided_slice %23 {offsets = [0, 8], sizes = [16, 8], strides = [1, 1]} : vector<16x32xf32> to vector<16x8xf32>
    %55 = vector.shape_cast %54 : vector<16x8xf32> to vector<2x1x8x8xf32>
    %56 = vector.extract_strided_slice %23 {offsets = [0, 16], sizes = [16, 8], strides = [1, 1]} : vector<16x32xf32> to vector<16x8xf32>
    %57 = vector.shape_cast %56 : vector<16x8xf32> to vector<2x1x8x8xf32>
    %58 = vector.extract_strided_slice %23 {offsets = [0, 24], sizes = [16, 8], strides = [1, 1]} : vector<16x32xf32> to vector<16x8xf32>
    %59 = vector.shape_cast %58 : vector<16x8xf32> to vector<2x1x8x8xf32>
    %60 = tpu.concatenate %53, %55, %57, %59 in 1 : vector<2x1x8x8xf32>, vector<2x1x8x8xf32>, vector<2x1x8x8xf32>, vector<2x1x8x8xf32> -> vector<2x4x8x8xf32>
    %61 = vector.shape_cast %60 : vector<2x4x8x8xf32> to vector<8x8x8xf32>
    %62 = arith.truncf %61 : vector<8x8x8xf32> to vector<8x8x8xbf16>
    "tpu.trace_start"() <{level = 10 : i32, message = "gqd,gkd->gqk"}> : () -> ()
    %cst_8 = arith.constant dense<0.000000e+00> : vector<8x8x8xf32>
    %63 = tpu.matmul %40, %51, %cst_8 {dimension_numbers = #tpu.dot_dimension_numbers<[2], [2], [1], [1], [0, 0, 0, 1, 1, 1], [0], [0]>} : vector<8x8x8xbf16>, vector<8x8x8xbf16>, vector<8x8x8xf32> -> vector<8x8x8xf32>
    "tpu.trace_stop"() : () -> ()
    %64 = vector.shape_cast %5 : vector<8x8xf32> to vector<1x8x8xf32>
    %65 = vector.broadcast %64 : vector<1x8x8xf32> to vector<8x8x8xf32>
    %66 = arith.addf %63, %65 : vector<8x8x8xf32>
    %cst_9 = arith.constant dense<0xFF800000> : vector<8x8xf32>
    %67 = vector.multi_reduction <maximumf>, %66, %cst_9 [2] : vector<8x8x8xf32> to vector<8x8xf32>
    %68 = vector.shape_cast %67 : vector<8x8xf32> to vector<8x8x1xf32>
    %69 = vector.broadcast %68 : vector<8x8x1xf32> to vector<8x8x8xf32>
    %70 = arith.subf %66, %69 : vector<8x8x8xf32>
    %71 = math.exp %70 : vector<8x8x8xf32>
    %cst_10 = arith.constant dense<0.000000e+00> : vector<8x8xf32>
    %72 = vector.multi_reduction <add>, %71, %cst_10 [2] : vector<8x8x8xf32> to vector<8x8xf32>
    %73 = vector.shape_cast %72 : vector<8x8xf32> to vector<8x8x1xf32>
    %74 = tpu.reciprocal %73 {approx = true} : vector<8x8x1xf32> -> vector<8x8x1xf32>
    %75 = vector.broadcast %74 : vector<8x8x1xf32> to vector<8x8x8xf32>
    %76 = arith.mulf %71, %75 : vector<8x8x8xf32>
    %77 = arith.truncf %76 : vector<8x8x8xf32> to vector<8x8x8xbf16>
    "tpu.trace_start"() <{level = 10 : i32, message = "gqk,gkd->gqd"}> : () -> ()
    %cst_11 = arith.constant dense<0.000000e+00> : vector<8x8x8xf32>
    %78 = tpu.matmul %77, %62, %cst_11 {dimension_numbers = #tpu.dot_dimension_numbers<[2], [1], [1], [2], [0, 0, 0, 1, 1, 2], [0], [0]>} : vector<8x8x8xbf16>, vector<8x8x8xbf16>, vector<8x8x8xf32> -> vector<8x8x8xf32>
    "tpu.trace_stop"() : () -> ()
    %79 = vector.shape_cast %78 : vector<8x8x8xf32> to vector<2x4x8x8xf32>
    %80 = vector.extract_strided_slice %79 {offsets = [0, 0, 0, 0], sizes = [2, 1, 8, 8], strides = [1, 1, 1, 1]} : vector<2x4x8x8xf32> to vector<2x1x8x8xf32>
    %81 = vector.shape_cast %80 : vector<2x1x8x8xf32> to vector<2x8x8xf32>
    %82 = vector.shape_cast %81 : vector<2x8x8xf32> to vector<16x8xf32>
    %83 = vector.extract_strided_slice %79 {offsets = [0, 1, 0, 0], sizes = [2, 1, 8, 8], strides = [1, 1, 1, 1]} : vector<2x4x8x8xf32> to vector<2x1x8x8xf32>
    %84 = vector.shape_cast %83 : vector<2x1x8x8xf32> to vector<2x8x8xf32>
    %85 = vector.shape_cast %84 : vector<2x8x8xf32> to vector<16x8xf32>
    %86 = vector.extract_strided_slice %79 {offsets = [0, 2, 0, 0], sizes = [2, 1, 8, 8], strides = [1, 1, 1, 1]} : vector<2x4x8x8xf32> to vector<2x1x8x8xf32>
    %87 = vector.shape_cast %86 : vector<2x1x8x8xf32> to vector<2x8x8xf32>
    %88 = vector.shape_cast %87 : vector<2x8x8xf32> to vector<16x8xf32>
    %89 = vector.extract_strided_slice %79 {offsets = [0, 3, 0, 0], sizes = [2, 1, 8, 8], strides = [1, 1, 1, 1]} : vector<2x4x8x8xf32> to vector<2x1x8x8xf32>
    %90 = vector.shape_cast %89 : vector<2x1x8x8xf32> to vector<2x8x8xf32>
    %91 = vector.shape_cast %90 : vector<2x8x8xf32> to vector<16x8xf32>
    %92 = tpu.concatenate %82, %85, %88, %91 in 1 : vector<16x8xf32>, vector<16x8xf32>, vector<16x8xf32>, vector<16x8xf32> -> vector<16x32xf32>
    %93 = arith.truncf %92 : vector<16x32xf32> to vector<16x32xbf16>
    %94 = vector.extract_strided_slice %1 {offsets = [0, 160], sizes = [32, 32], strides = [1, 1]} : vector<32x192xbf16> to vector<32x32xbf16>
    %cst_12 = arith.constant dense<0.000000e+00> : vector<16x32xf32>
    %95 = tpu.matmul %93, %94, %cst_12 {dimension_numbers = #tpu.dot_dimension_numbers<[1], [0], [0], [1], [0, 0, 1, 1], [], []>} : vector<16x32xbf16>, vector<32x32xbf16>, vector<16x32xf32> -> vector<16x32xf32>
    %96 = arith.addf %95, %0 : vector<16x32xf32>
    %97 = arith.mulf %96, %96 : vector<16x32xf32>
    %cst_13 = arith.constant dense<0.000000e+00> : vector<16xf32>
    %98 = vector.multi_reduction <add>, %97, %cst_13 [1] : vector<16x32xf32> to vector<16xf32>
    %99 = vector.shape_cast %98 : vector<16xf32> to vector<16x1xf32>
    %cst_14 = arith.constant 3.200000e+01 : f32
    %100 = vector.broadcast %cst_14 : f32 to vector<16x1xf32>
    %101 = arith.divf %99, %100 : vector<16x1xf32>
    %cst_15 = arith.constant 9.99999997E-7 : f32
    %102 = vector.broadcast %cst_15 : f32 to vector<16x1xf32>
    %103 = arith.addf %101, %102 : vector<16x1xf32>
    %104 = math.rsqrt %103 : vector<16x1xf32>
    %105 = vector.broadcast %104 : vector<16x1xf32> to vector<16x32xf32>
    %106 = arith.mulf %96, %105 : vector<16x32xf32>
    %107 = arith.truncf %106 : vector<16x32xf32> to vector<16x32xbf16>
    %c0_16 = arith.constant 0 : index
    %c0_17 = arith.constant 0 : index
    %108 = vector.load %arg3[%c0_16, %c0_17] : memref<32x512xbf16, #tpu.memory_space<vmem>>, vector<32x512xbf16>
    %cst_18 = arith.constant dense<0.000000e+00> : vector<16x512xf32>
    %109 = tpu.matmul %107, %108, %cst_18 {dimension_numbers = #tpu.dot_dimension_numbers<[1], [0], [0], [1], [0, 0, 1, 1], [], []>} : vector<16x32xbf16>, vector<32x512xbf16>, vector<16x512xf32> -> vector<16x512xf32>
    %110 = arith.truncf %109 : vector<16x512xf32> to vector<16x512xbf16>
    %111 = vector.extract_strided_slice %110 {offsets = [0, 0], sizes = [16, 256], strides = [1, 1]} : vector<16x512xbf16> to vector<16x256xbf16>
    %112 = vector.extract_strided_slice %110 {offsets = [0, 256], sizes = [16, 256], strides = [1, 1]} : vector<16x512xbf16> to vector<16x256xbf16>
    %113 = arith.negf %111 : vector<16x256xbf16>
    %114 = math.exp %113 : vector<16x256xbf16>
    %cst_19 = arith.constant 1.000000e+00 : bf16
    %115 = vector.broadcast %cst_19 : bf16 to vector<16x256xbf16>
    %116 = arith.addf %115, %114 : vector<16x256xbf16>
    %117 = arith.divf %115, %116 : vector<16x256xbf16>
    %118 = arith.mulf %111, %117 : vector<16x256xbf16>
    %119 = arith.mulf %118, %112 : vector<16x256xbf16>
    %c0_20 = arith.constant 0 : index
    %c0_21 = arith.constant 0 : index
    %120 = vector.load %arg4[%c0_20, %c0_21] : memref<256x32xbf16, #tpu.memory_space<vmem>>, vector<256x32xbf16>
    %cst_22 = arith.constant dense<0.000000e+00> : vector<16x32xf32>
    %121 = tpu.matmul %119, %120, %cst_22 {dimension_numbers = #tpu.dot_dimension_numbers<[1], [0], [0], [1], [0, 0, 1, 1], [], []>} : vector<16x256xbf16>, vector<256x32xbf16>, vector<16x32xf32> -> vector<16x32xf32>
    %122 = arith.addf %121, %96 : vector<16x32xf32>
    %c0_23 = arith.constant 0 : index
    %c0_24 = arith.constant 0 : index
    %123 = vector.load %arg5[%c0_23, %c0_24] : memref<16x32xf32, #tpu.memory_space<vmem>>, vector<16x32xf32>
    tpu.vector_store %arg5[%c0_23, %c0_24], %122 {strides = array<i32>} : memref<16x32xf32, #tpu.memory_space<vmem>>, vector<16x32xf32>,
    return
  }
}

</mosaic_0001>

<llo_original>
// kernel: tpu_custom_call.1
$region0: #{tpu_custom_call.1}
  #allocation0 [shape = 'u32[]', space=smem, size = 0x4, offset = 0x4, fixed_abs, tag = 'smem constant byte address 0x4 - core index']
  #allocation1 [shape = 'u32[72,128]{1,0:T(1,128)}', space=vmem, size = 0x9000, scoped, tag = 'internal scratch']
  %s0 = inlined_call_operand.vmem [shape: f32[16,32], index: 0, kind: input, shape index: {}]
  %s1 = inlined_call_operand.vmem [shape: bf16[32,192], index: 1, kind: input, shape index: {}]
  %s2 = inlined_call_operand.vmem [shape: f32[16,72], index: 2, kind: input, shape index: {}]
  %s3 = inlined_call_operand.vmem [shape: bf16[32,512], index: 3, kind: input, shape index: {}]
  %s4 = inlined_call_operand.vmem [shape: bf16[256,32], index: 4, kind: input, shape index: {}]
  %s5 = inlined_call_operand.hbm [shape: f32[16,32], index: 5, kind: output, shape index: {}]
  %s6 = sld [smem:[#allocation0]]
  $region30: #{tpu_custom_call.1} parent=0
    _
  %s8 = ssub.s32 1, %s6
  %s9 = scalar_select 0, %s8, %s6
  $region1: #{tpu_custom_call.1} parent=0
    #allocation2 [shape = 'u8[8192]{0}', space=vmem, size = 0x2000, scoped, tag = 'output window, operand 0, single buffered']
    #allocation3 [shape = 's32[1]{0}', space=sflag, size = 0x4, scoped, tag = 'scoped memory for tpu_custom_call.1']
    %10 = vsyncpa [#allocation3], 0
    // Predicated region
    $region2: #{tpu_custom_call.1} parent=1 // pred_check
      _
    $region3: #{tpu_custom_call.1} parent=1 // pred_check_branch
      %12 = sbr.rel (0) target = $region5
    $region4: #{tpu_custom_call.1} parent=1 // pred_region
      _
    $region5: #{tpu_custom_call.1} parent=1 // pred_fallthru
      _
    // Predicated region
    $region6: #{tpu_custom_call.1} parent=1 // pred_check
      _
    $region7: #{tpu_custom_call.1} parent=1 // pred_check_branch
      %14 = sbr.rel (0) target = $region9
    $region8: #{tpu_custom_call.1} parent=1 // pred_region
      _
    $region9: #{tpu_custom_call.1} parent=1 // pred_fallthru
      _
    // Predicated region
    $region10: #{tpu_custom_call.1} parent=1 // pred_check
      _
    $region11: #{tpu_custom_call.1} parent=1 // pred_check_branch
      %16 = sbr.rel (0) target = $region13
    $region12: #{tpu_custom_call.1} parent=1 // pred_region
      _
    $region13: #{tpu_custom_call.1} parent=1 // pred_fallthru
      _
    // Predicated region
    $region14: #{tpu_custom_call.1} parent=1 // pred_check
      _
    $region15: #{tpu_custom_call.1} parent=1 // pred_check_branch
      %18 = sbr.rel (0) target = $region17
    $region16: #{tpu_custom_call.1} parent=1 // pred_region
      _
    $region17: #{tpu_custom_call.1} parent=1 // pred_fallthru
      _
    // Predicated region
    $region18: #{tpu_custom_call.1} parent=1 // pred_check
      _
    $region19: #{tpu_custom_call.1} parent=1 // pred_check_branch
      %20 = sbr.rel (0) target = $region21
    $region20: #{tpu_custom_call.1} parent=1 // pred_region
      _
    $region21: #{tpu_custom_call.1} parent=1 // pred_fallthru
      _
    %v23 = vld [vmem:[%s0] sm:$0xff]
    %v24 = vld [vmem:[%s0 + $0x8] sm:$0xff]
    %v25 = vld [vmem:[%s1] sm:$0xff]
    %v26 = vld [vmem:[%s1 + $0x8] sm:$0xff]
    %v27 = vld [vmem:[%s1 + $0x10] sm:$0xff]
    %v28 = vld [vmem:[%s1 + $0x18] sm:$0xff]
    %v29 = vld [vmem:[%s2] sm:$0xff]
    %v30 = vld [vmem:[%s2 + $0x8] sm:$0xff]
    %v31 = vmul.f32 %v23, %v23
    %v32 = vmul.f32 %v24, %v24
    %vm33 = vcmask 261120
    %v34 = vsel %vm33, %v31, 0.0
    %35 = vadd.xlane.f32.xlu0 %v34
    %v36 = vpop.xlane.xlu0 %35
    %v37 = vsel %vm33, %v32, 0.0
    %38 = vadd.xlane.f32.xlu0 %v37
    %v39 = vpop.xlane.xlu0 %38
    %v40 = vrcp.pop 32.0
    %v41 = vmul.f32 32.0, %v40
    %v42 = vsub.f32 1.0, %v41
    %v43 = vmul.f32 %v40, %v42
    %v44 = vadd.f32 %v40, %v43
    %vm45 = vweird.f32 %v40
    %v46 = vsel %vm45, %v40, %v44
    %v47 = vmul.f32 %v36, %v46
    %v48 = vmul.f32 %v39, %v46
    %v49 = vadd.f32 %v47, 1e-06
    %v50 = vadd.f32 %v48, 1e-06
    %v51 = vrsqrt.pop %v49
    %v52 = vmul.f32 %v51, %v49
    %v53 = vmul.f32 %v52, %v51
    %v54 = vmul.f32 0.5, %v53
    %v55 = vsub.f32 1.5, %v54
    %v56 = vmul.f32 %v51, %v55
    %vm57 = vweird.f32 %v49
    %vm58 = vweird.f32 %v51
    %vm59 = vmor %vm57, %vm58
    %v60 = vsel %vm59, %v51, %v56
    %v61 = vrsqrt.pop %v50
    %v62 = vmul.f32 %v61, %v50
    %v63 = vmul.f32 %v62, %v61
    %v64 = vmul.f32 0.5, %v63
    %v65 = vsub.f32 1.5, %v64
    %v66 = vmul.f32 %v61, %v65
    %vm67 = vweird.f32 %v50
    %vm68 = vweird.f32 %v61
    %vm69 = vmor %vm67, %vm68
    %v70 = vsel %vm69, %v61, %v66
    %v71 = vmul.f32 %v23, %v60
    %v72 = vmul.f32 %v24, %v70
    %v73 = vpack.c.bf16 %v72, %v71
    %v78 = vunpack.c.l.b16 %v25
    %v79 = vunpack.c.h.b16 %v25
    %v80 = vunpack.c.l.b16 %v26
    %v81 = vunpack.c.h.b16 %v26
    %v82 = vunpack.c.l.b16 %v27
    %v83 = vunpack.c.h.b16 %v27
    %v84 = vunpack.c.l.b16 %v28
    %v85 = vunpack.c.h.b16 %v28
    %v86 = vpack.c.b16 %v80, %v78
    %v87 = vpack.c.b16 %v81, %v79
    %v88 = vpack.c.b16 %v84, %v82
    %v89 = vpack.c.b16 %v85, %v83
    %v95 = vsel %vm33, %v73, 0
    %97 = vmatpush.bf16.msra.mxu0 0
    %98 = vmatpush.bf16.msra.mxu0 0
    %99 = vmatpush.bf16.msra.mxu0 0
    %100 = vmatpush.bf16.msra.mxu0 0
    %101 = vmatpush.bf16.msra.mxu0 0
    %102 = vmatpush.bf16.msra.mxu0 0
    %103 = vmatpush.bf16.msra.mxu0 %v88
    %104 = vmatpush.bf16.msra.mxu0 %v86
    %105 = vmatmul.bf16.gmra.mxu0 %v95
    %v106 = vpop.f32.mrf.mxu0
    %v107 = vadd.f32 0.0, %v106
    %v108 = vpop.f32.mrf.mxu0
    %v109 = vadd.f32 0.0, %v108
    %110 = vdwg.mxu0
    %111 = vmatpush.bf16.msra.mxu0 0
    %112 = vmatpush.bf16.msra.mxu0 0
    %113 = vmatpush.bf16.msra.mxu0 0
    %114 = vmatpush.bf16.msra.mxu0 0
    %115 = vmatpush.bf16.msra.mxu0 0
    %116 = vmatpush.bf16.msra.mxu0 0
    %117 = vmatpush.bf16.msra.mxu0 %v89
    %118 = vmatpush.bf16.msra.mxu0 %v87
    %119 = vmatmul.bf16.gmra.mxu0 %v95
    %v120 = vpop.f32.mrf.mxu0
    %v121 = vadd.f32 0.0, %v120
    %v122 = vpop.f32.mrf.mxu0
    %v123 = vadd.f32 0.0, %v122
    %124 = vdwg.mxu0
    %v125 = vmul.f32 %v107, %v29
    %v126 = vmul.f32 %v109, %v30
    %129 = vrot.lane.b32.xlu0 %v125, 96
    %v130 = vpop.permute.xlu0 %129
    %131 = vrot.lane.b32.xlu0 %v126, 96
    %v132 = vpop.permute.xlu0 %131
    %v135 = vadd.f32 %v125, %v130
    %v136 = vadd.f32 %v126, %v132
    %139 = vrot.lane.b32.xlu0 %v29, 64
    %v140 = vpop.permute.xlu0 %139
    %141 = vrot.lane.b32.xlu0 %v30, 64
    %v142 = vpop.permute.xlu0 %141
    %v145 = vmul.f32 %v107, %v140
    %v146 = vmul.f32 %v109, %v142
    %149 = vrot.lane.b32.xlu0 %v145, 96
    %v150 = vpop.permute.xlu0 %149
    %151 = vrot.lane.b32.xlu0 %v146, 96
    %v152 = vpop.permute.xlu0 %151
    %v155 = vadd.f32 %v145, %v150
    %v156 = vadd.f32 %v146, %v152
    %159 = vrot.lane.b32.xlu0 %v135, 120
    %v160 = vpop.permute.xlu0 %159
    %161 = vrot.lane.b32.xlu0 %v136, 120
    %v162 = vpop.permute.xlu0 %161
    %165 = vrot.lane.b32.xlu0 %v135, 112
    %v166 = vpop.permute.xlu0 %165
    %167 = vrot.lane.b32.xlu0 %v136, 112
    %v168 = vpop.permute.xlu0 %167
    %171 = vrot.lane.b32.xlu0 %v135, 104
    %v172 = vpop.permute.xlu0 %171
    %173 = vrot.lane.b32.xlu0 %v136, 104
    %v174 = vpop.permute.xlu0 %173
    %v177 = vpack.c.bf16 %v135, %v135
    %v178 = vpack.c.bf16 %v160, %v160
    %v179 = vpack.c.bf16 %v166, %v166
    %v180 = vpack.c.bf16 %v172, %v172
    %v181 = vpack.c.bf16 %v136, %v136
    %v182 = vpack.c.bf16 %v162, %v162
    %v183 = vpack.c.bf16 %v168, %v168
    %v184 = vpack.c.bf16 %v174, %v174
    %187 = vrot.lane.b32.xlu0 %v155, 120
    %v188 = vpop.permute.xlu0 %187
    %189 = vrot.lane.b32.xlu0 %v156, 120
    %v190 = vpop.permute.xlu0 %189
    %193 = vrot.lane.b32.xlu0 %v155, 112
    %v194 = vpop.permute.xlu0 %193
    %195 = vrot.lane.b32.xlu0 %v156, 112
    %v196 = vpop.permute.xlu0 %195
    %199 = vrot.lane.b32.xlu0 %v155, 104
    %v200 = vpop.permute.xlu0 %199
    %201 = vrot.lane.b32.xlu0 %v156, 104
    %v202 = vpop.permute.xlu0 %201
    %v205 = vpack.c.bf16 %v155, %v155
    %v206 = vpack.c.bf16 %v188, %v188
    %v207 = vpack.c.bf16 %v194, %v194
    %v208 = vpack.c.bf16 %v200, %v200
    %v209 = vpack.c.bf16 %v156, %v156
    %v210 = vpack.c.bf16 %v190, %v190
    %v211 = vpack.c.bf16 %v196, %v196
    %v212 = vpack.c.bf16 %v202, %v202
    %215 = vrot.lane.b32.xlu0 %v121, 120
    %v216 = vpop.permute.xlu0 %215
    %217 = vrot.lane.b32.xlu0 %v123, 120
    %v218 = vpop.permute.xlu0 %217
    %221 = vrot.lane.b32.xlu0 %v121, 112
    %v222 = vpop.permute.xlu0 %221
    %223 = vrot.lane.b32.xlu0 %v123, 112
    %v224 = vpop.permute.xlu0 %223
    %227 = vrot.lane.b32.xlu0 %v121, 104
    %v228 = vpop.permute.xlu0 %227
    %229 = vrot.lane.b32.xlu0 %v123, 104
    %v230 = vpop.permute.xlu0 %229
    %v233 = vpack.c.bf16 %v121, %v121
    %v234 = vpack.c.bf16 %v216, %v216
    %v235 = vpack.c.bf16 %v222, %v222
    %v236 = vpack.c.bf16 %v228, %v228
    %v237 = vpack.c.bf16 %v123, %v123
    %v238 = vpack.c.bf16 %v218, %v218
    %v239 = vpack.c.bf16 %v224, %v224
    %v240 = vpack.c.bf16 %v230, %v230
    %v242 = vunpack.c.l.b16 %v205
    %v243 = vpack.c.b16 %v242, %v242
    %244 = vrot.lane.b32.xlu0 %v243, 64
    %v245 = vpop.permute.xlu0 %244
    %vm246 = vcmask 64512
    %v248 = vsel %vm246, %v177, 0
    %v251 = vsel %vm246, %v245, 0
    %253 = vmatpush.bf16.xpose.msra.mxu0 0
    %254 = vmatpush.bf16.xpose.msra.mxu0 0
    %255 = vmatpush.bf16.xpose.msra.mxu0 0
    %256 = vmatpush.bf16.xpose.msra.mxu0 0
    %257 = vmatpush.bf16.xpose.msra.mxu0 0
    %258 = vmatpush.bf16.xpose.msra.mxu0 0
    %259 = vmatpush.bf16.xpose.msra.mxu0 0
    %260 = vmatpush.bf16.xpose.msra.mxu0 %v251
    %261 = vmatmul.bf16.gmra.mxu0 %v248
    %v262 = vpop.f32.mrf.mxu0
    %v263 = vadd.f32 %v140, %v262
    %v264 = vpop.f32.mrf.mxu0
    %265 = vdwg.mxu0
    %v267 = vunpack.c.l.b16 %v206
    %v268 = vpack.c.b16 %v267, %v267
    %269 = vrot.lane.b32.xlu0 %v268, 64
    %v270 = vpop.permute.xlu0 %269
    %v272 = vsel %vm246, %v178, 0
    %v275 = vsel %vm246, %v270, 0
    %277 = vmatpush.bf16.xpose.msra.mxu0 0
    %278 = vmatpush.bf16.xpose.msra.mxu0 0
    %279 = vmatpush.bf16.xpose.msra.mxu0 0
    %280 = vmatpush.bf16.xpose.msra.mxu0 0
    %281 = vmatpush.bf16.xpose.msra.mxu0 0
    %282 = vmatpush.bf16.xpose.msra.mxu0 0
    %283 = vmatpush.bf16.xpose.msra.mxu0 0
    %284 = vmatpush.bf16.xpose.msra.mxu0 %v275
    %285 = vmatmul.bf16.gmra.mxu0 %v272
    %v286 = vpop.f32.mrf.mxu0
    %v287 = vadd.f32 %v140, %v286
    %v288 = vpop.f32.mrf.mxu0
    %289 = vdwg.mxu0
    %v291 = vunpack.c.l.b16 %v207
    %v292 = vpack.c.b16 %v291, %v291
    %293 = vrot.lane.b32.xlu0 %v292, 64
    %v294 = vpop.permute.xlu0 %293
    %v296 = vsel %vm246, %v179, 0
    %v299 = vsel %vm246, %v294, 0
    %301 = vmatpush.bf16.xpose.msra.mxu0 0
    %302 = vmatpush.bf16.xpose.msra.mxu0 0
    %303 = vmatpush.bf16.xpose.msra.mxu0 0
    %304 = vmatpush.bf16.xpose.msra.mxu0 0
    %305 = vmatpush.bf16.xpose.msra.mxu0 0
    %306 = vmatpush.bf16.xpose.msra.mxu0 0
    %307 = vmatpush.bf16.xpose.msra.mxu0 0
    %308 = vmatpush.bf16.xpose.msra.mxu0 %v299
    %309 = vmatmul.bf16.gmra.mxu0 %v296
    %v310 = vpop.f32.mrf.mxu0
    %v311 = vadd.f32 %v140, %v310
    %v312 = vpop.f32.mrf.mxu0
    %313 = vdwg.mxu0
    %v315 = vunpack.c.l.b16 %v208
    %v316 = vpack.c.b16 %v315, %v315
    %317 = vrot.lane.b32.xlu0 %v316, 64
    %v318 = vpop.permute.xlu0 %317
    %v320 = vsel %vm246, %v180, 0
    %v323 = vsel %vm246, %v318, 0
    %325 = vmatpush.bf16.xpose.msra.mxu0 0
    %326 = vmatpush.bf16.xpose.msra.mxu0 0
    %327 = vmatpush.bf16.xpose.msra.mxu0 0
    %328 = vmatpush.bf16.xpose.msra.mxu0 0
    %329 = vmatpush.bf16.xpose.msra.mxu0 0
    %330 = vmatpush.bf16.xpose.msra.mxu0 0
    %331 = vmatpush.bf16.xpose.msra.mxu0 0
    %332 = vmatpush.bf16.xpose.msra.mxu0 %v323
    %333 = vmatmul.bf16.gmra.mxu0 %v320
    %v334 = vpop.f32.mrf.mxu0
    %v335 = vadd.f32 %v140, %v334
    %v336 = vpop.f32.mrf.mxu0
    %337 = vdwg.mxu0
    %v339 = vunpack.c.l.b16 %v209
    %v340 = vpack.c.b16 %v339, %v339
    %341 = vrot.lane.b32.xlu0 %v340, 64
    %v342 = vpop.permute.xlu0 %341
    %v344 = vsel %vm246, %v181, 0
    %v347 = vsel %vm246, %v342, 0
    %349 = vmatpush.bf16.xpose.msra.mxu0 0
    %350 = vmatpush.bf16.xpose.msra.mxu0 0
    %351 = vmatpush.bf16.xpose.msra.mxu0 0
    %352 = vmatpush.bf16.xpose.msra.mxu0 0
    %353 = vmatpush.bf16.xpose.msra.mxu0 0
    %354 = vmatpush.bf16.xpose.msra.mxu0 0
    %355 = vmatpush.bf16.xpose.msra.mxu0 0
    %356 = vmatpush.bf16.xpose.msra.mxu0 %v347
    %357 = vmatmul.bf16.gmra.mxu0 %v344
    %v358 = vpop.f32.mrf.mxu0
    %v359 = vadd.f32 %v140, %v358
    %v360 = vpop.f32.mrf.mxu0
    %361 = vdwg.mxu0
    %v363 = vunpack.c.l.b16 %v210
    %v364 = vpack.c.b16 %v363, %v363
    %365 = vrot.lane.b32.xlu0 %v364, 64
    %v366 = vpop.permute.xlu0 %365
    %v368 = vsel %vm246, %v182, 0
    %v371 = vsel %vm246, %v366, 0
    %373 = vmatpush.bf16.xpose.msra.mxu0 0
    %374 = vmatpush.bf16.xpose.msra.mxu0 0
    %375 = vmatpush.bf16.xpose.msra.mxu0 0
    %376 = vmatpush.bf16.xpose.msra.mxu0 0
    %377 = vmatpush.bf16.xpose.msra.mxu0 0
    %378 = vmatpush.bf16.xpose.msra.mxu0 0
    %379 = vmatpush.bf16.xpose.msra.mxu0 0
    %380 = vmatpush.bf16.xpose.msra.mxu0 %v371
    %381 = vmatmul.bf16.gmra.mxu0 %v368
    %v382 = vpop.f32.mrf.mxu0
    %v383 = vadd.f32 %v140, %v382
    %v384 = vpop.f32.mrf.mxu0
    %385 = vdwg.mxu0
    %v387 = vunpack.c.l.b16 %v211
    %v388 = vpack.c.b16 %v387, %v387
    %389 = vrot.lane.b32.xlu0 %v388, 64
    %v390 = vpop.permute.xlu0 %389
    %v392 = vsel %vm246, %v183, 0
    %v395 = vsel %vm246, %v390, 0
    %397 = vmatpush.bf16.xpose.msra.mxu0 0
    %398 = vmatpush.bf16.xpose.msra.mxu0 0
    %399 = vmatpush.bf16.xpose.msra.mxu0 0
    %400 = vmatpush.bf16.xpose.msra.mxu0 0
    %401 = vmatpush.bf16.xpose.msra.mxu0 0
    %402 = vmatpush.bf16.xpose.msra.mxu0 0
    %403 = vmatpush.bf16.xpose.msra.mxu0 0
    %404 = vmatpush.bf16.xpose.msra.mxu0 %v395
    %405 = vmatmul.bf16.gmra.mxu0 %v392
    %v406 = vpop.f32.mrf.mxu0
    %v407 = vadd.f32 %v140, %v406
    %v408 = vpop.f32.mrf.mxu0
    %409 = vdwg.mxu0
    %v411 = vunpack.c.l.b16 %v212
    %v412 = vpack.c.b16 %v411, %v411
    %413 = vrot.lane.b32.xlu0 %v412, 64
    %v414 = vpop.permute.xlu0 %413
    %v416 = vsel %vm246, %v184, 0
    %v419 = vsel %vm246, %v414, 0
    %421 = vmatpush.bf16.xpose.msra.mxu0 0
    %422 = vmatpush.bf16.xpose.msra.mxu0 0
    %423 = vmatpush.bf16.xpose.msra.mxu0 0
    %424 = vmatpush.bf16.xpose.msra.mxu0 0
    %425 = vmatpush.bf16.xpose.msra.mxu0 0
    %426 = vmatpush.bf16.xpose.msra.mxu0 0
    %427 = vmatpush.bf16.xpose.msra.mxu0 0
    %428 = vmatpush.bf16.xpose.msra.mxu0 %v419
    %429 = vmatmul.bf16.gmra.mxu0 %v416
    %v430 = vpop.f32.mrf.mxu0
    %v431 = vadd.f32 %v140, %v430
    %v432 = vpop.f32.mrf.mxu0
    %433 = vdwg.mxu0
    %v434 = vsel %vm246, %v263, -inf
    %435 = vmax.xlane.f32.xlu0 %v434
    %v436 = vpop.xlane.xlu0 %435
    %v437 = vsel %vm246, %v287, -inf
    %438 = vmax.xlane.f32.xlu0 %v437
    %v439 = vpop.xlane.xlu0 %438
    %v440 = vsel %vm246, %v311, -inf
    %441 = vmax.xlane.f32.xlu0 %v440
    %v442 = vpop.xlane.xlu0 %441
    %v443 = vsel %vm246, %v335, -inf
    %444 = vmax.xlane.f32.xlu0 %v443
    %v445 = vpop.xlane.xlu0 %444
    %v446 = vsel %vm246, %v359, -inf
    %447 = vmax.xlane.f32.xlu0 %v446
    %v448 = vpop.xlane.xlu0 %447
    %v449 = vsel %vm246, %v383, -inf
    %450 = vmax.xlane.f32.xlu0 %v449
    %v451 = vpop.xlane.xlu0 %450
    %v452 = vsel %vm246, %v407, -inf
    %453 = vmax.xlane.f32.xlu0 %v452
    %v454 = vpop.xlane.xlu0 %453
    %v455 = vsel %vm246, %v431, -inf
    %456 = vmax.xlane.f32.xlu0 %v455
    %v457 = vpop.xlane.xlu0 %456
    %v458 = vsub.f32 %v263, %v436
    %v459 = vsub.f32 %v287, %v439
    %v460 = vsub.f32 %v311, %v442
    %v461 = vsub.f32 %v335, %v445
    %v462 = vsub.f32 %v359, %v448
    %v463 = vsub.f32 %v383, %v451
    %v464 = vsub.f32 %v407, %v454
    %v465 = vsub.f32 %v431, %v457
    %v466 = vmul.f32 %v458, 1.442695
    %v467 = vpow.pop %v466
    %v468 = vmul.f32 %v459, 1.442695
    %v469 = vpow.pop %v468
    %v470 = vmul.f32 %v460, 1.442695
    %v471 = vpow.pop %v470
    %v472 = vmul.f32 %v461, 1.442695
    %v473 = vpow.pop %v472
    %v474 = vmul.f32 %v462, 1.442695
    %v475 = vpow.pop %v474
    %v476 = vmul.f32 %v463, 1.442695
    %v477 = vpow.pop %v476
    %v478 = vmul.f32 %v464, 1.442695
    %v479 = vpow.pop %v478
    %v480 = vmul.f32 %v465, 1.442695
    %v481 = vpow.pop %v480
    %v482 = vsel %vm246, %v467, 0.0
    %483 = vadd.xlane.f32.xlu0 %v482
    %v484 = vpop.xlane.xlu0 %483
    %v485 = vsel %vm246, %v469, 0.0
    %486 = vadd.xlane.f32.xlu0 %v485
    %v487 = vpop.xlane.xlu0 %486
    %v488 = vsel %vm246, %v471, 0.0
    %489 = vadd.xlane.f32.xlu0 %v488
    %v490 = vpop.xlane.xlu0 %489
    %v491 = vsel %vm246, %v473, 0.0
    %492 = vadd.xlane.f32.xlu0 %v491
    %v493 = vpop.xlane.xlu0 %492
    %v494 = vsel %vm246, %v475, 0.0
    %495 = vadd.xlane.f32.xlu0 %v494
    %v496 = vpop.xlane.xlu0 %495
    %v497 = vsel %vm246, %v477, 0.0
    %498 = vadd.xlane.f32.xlu0 %v497
    %v499 = vpop.xlane.xlu0 %498
    %v500 = vsel %vm246, %v479, 0.0
    %501 = vadd.xlane.f32.xlu0 %v500
    %v502 = vpop.xlane.xlu0 %501
    %v503 = vsel %vm246, %v481, 0.0
    %504 = vadd.xlane.f32.xlu0 %v503
    %v505 = vpop.xlane.xlu0 %504
    %v506 = vrcp.pop %v484
    %v507 = vrcp.pop %v487
    %v508 = vrcp.pop %v490
    %v509 = vrcp.pop %v493
    %v510 = vrcp.pop %v496
    %v511 = vrcp.pop %v499
    %v512 = vrcp.pop %v502
    %v513 = vrcp.pop %v505
    %v514 = vmul.f32 %v467, %v506
    %v515 = vmul.f32 %v469, %v507
    %v516 = vmul.f32 %v471, %v508
    %v517 = vmul.f32 %v473, %v509
    %v518 = vmul.f32 %v475, %v510
    %v519 = vmul.f32 %v477, %v511
    %v520 = vmul.f32 %v479, %v512
    %v521 = vmul.f32 %v481, %v513
    %v522 = vpack.c.bf16 %v514, %v514
    %v523 = vpack.c.bf16 %v515, %v515
    %v524 = vpack.c.bf16 %v516, %v516
    %v525 = vpack.c.bf16 %v517, %v517
    %v526 = vpack.c.bf16 %v518, %v518
    %v527 = vpack.c.bf16 %v519, %v519
    %v528 = vpack.c.bf16 %v520, %v520
    %v529 = vpack.c.bf16 %v521, %v521
    %v531 = vsel %vm246, %v522, 0
    %vm533 = vcmask 1043456
    %v535 = vsel %vm533, %v233, 0
    %537 = vmatpush.bf16.msra.mxu0 0
    %538 = vmatpush.bf16.msra.mxu0 0
    %539 = vmatpush.bf16.msra.mxu0 0
    %540 = vmatpush.bf16.msra.mxu0 0
    %541 = vmatpush.bf16.msra.mxu0 0
    %542 = vmatpush.bf16.msra.mxu0 0
    %543 = vmatpush.bf16.msra.mxu0 0
    %544 = vmatpush.bf16.msra.mxu0 %v535
    %545 = vmatmul.bf16.gmra.mxu0 %v531
    %v546 = vpop.f32.mrf.mxu0
    %v547 = vadd.f32 0.0, %v546
    %v548 = vpop.f32.mrf.mxu0
    %549 = vdwg.mxu0
    %v551 = vsel %vm246, %v523, 0
    %v554 = vsel %vm533, %v234, 0
    %556 = vmatpush.bf16.msra.mxu0 0
    %557 = vmatpush.bf16.msra.mxu0 0
    %558 = vmatpush.bf16.msra.mxu0 0
    %559 = vmatpush.bf16.msra.mxu0 0
    %560 = vmatpush.bf16.msra.mxu0 0
    %561 = vmatpush.bf16.msra.mxu0 0
    %562 = vmatpush.bf16.msra.mxu0 0
    %563 = vmatpush.bf16.msra.mxu0 %v554
    %564 = vmatmul.bf16.gmra.mxu0 %v551
    %v565 = vpop.f32.mrf.mxu0
    %v566 = vadd.f32 0.0, %v565
    %v567 = vpop.f32.mrf.mxu0
    %568 = vdwg.mxu0
    %v570 = vsel %vm246, %v524, 0
    %v573 = vsel %vm533, %v235, 0
    %575 = vmatpush.bf16.msra.mxu0 0
    %576 = vmatpush.bf16.msra.mxu0 0
    %577 = vmatpush.bf16.msra.mxu0 0
    %578 = vmatpush.bf16.msra.mxu0 0
    %579 = vmatpush.bf16.msra.mxu0 0
    %580 = vmatpush.bf16.msra.mxu0 0
    %581 = vmatpush.bf16.msra.mxu0 0
    %582 = vmatpush.bf16.msra.mxu0 %v573
    %583 = vmatmul.bf16.gmra.mxu0 %v570
    %v584 = vpop.f32.mrf.mxu0
    %v585 = vadd.f32 0.0, %v584
    %v586 = vpop.f32.mrf.mxu0
    %587 = vdwg.mxu0
    %v589 = vsel %vm246, %v525, 0
    %v592 = vsel %vm533, %v236, 0
    %594 = vmatpush.bf16.msra.mxu0 0
    %595 = vmatpush.bf16.msra.mxu0 0
    %596 = vmatpush.bf16.msra.mxu0 0
    %597 = vmatpush.bf16.msra.mxu0 0
    %598 = vmatpush.bf16.msra.mxu0 0
    %599 = vmatpush.bf16.msra.mxu0 0
    %600 = vmatpush.bf16.msra.mxu0 0
    %601 = vmatpush.bf16.msra.mxu0 %v592
    %602 = vmatmul.bf16.gmra.mxu0 %v589
    %v603 = vpop.f32.mrf.mxu0
    %v604 = vadd.f32 0.0, %v603
    %v605 = vpop.f32.mrf.mxu0
    %606 = vdwg.mxu0
    %v608 = vsel %vm246, %v526, 0
    %v611 = vsel %vm533, %v237, 0
    %613 = vmatpush.bf16.msra.mxu0 0
    %614 = vmatpush.bf16.msra.mxu0 0
    %615 = vmatpush.bf16.msra.mxu0 0
    %616 = vmatpush.bf16.msra.mxu0 0
    %617 = vmatpush.bf16.msra.mxu0 0
    %618 = vmatpush.bf16.msra.mxu0 0
    %619 = vmatpush.bf16.msra.mxu0 0
    %620 = vmatpush.bf16.msra.mxu0 %v611
    %621 = vmatmul.bf16.gmra.mxu0 %v608
    %v622 = vpop.f32.mrf.mxu0
    %v623 = vadd.f32 0.0, %v622
    %v624 = vpop.f32.mrf.mxu0
    %625 = vdwg.mxu0
    %v627 = vsel %vm246, %v527, 0
    %v630 = vsel %vm533, %v238, 0
    %632 = vmatpush.bf16.msra.mxu0 0
    %633 = vmatpush.bf16.msra.mxu0 0
    %634 = vmatpush.bf16.msra.mxu0 0
    %635 = vmatpush.bf16.msra.mxu0 0
    %636 = vmatpush.bf16.msra.mxu0 0
    %637 = vmatpush.bf16.msra.mxu0 0
    %638 = vmatpush.bf16.msra.mxu0 0
    %639 = vmatpush.bf16.msra.mxu0 %v630
    %640 = vmatmul.bf16.gmra.mxu0 %v627
    %v641 = vpop.f32.mrf.mxu0
    %v642 = vadd.f32 0.0, %v641
    %v643 = vpop.f32.mrf.mxu0
    %644 = vdwg.mxu0
    %v646 = vsel %vm246, %v528, 0
    %v649 = vsel %vm533, %v239, 0
    %651 = vmatpush.bf16.msra.mxu0 0
    %652 = vmatpush.bf16.msra.mxu0 0
    %653 = vmatpush.bf16.msra.mxu0 0
    %654 = vmatpush.bf16.msra.mxu0 0
    %655 = vmatpush.bf16.msra.mxu0 0
    %656 = vmatpush.bf16.msra.mxu0 0
    %657 = vmatpush.bf16.msra.mxu0 0
    %658 = vmatpush.bf16.msra.mxu0 %v649
    %659 = vmatmul.bf16.gmra.mxu0 %v646
    %v660 = vpop.f32.mrf.mxu0
    %v661 = vadd.f32 0.0, %v660
    %v662 = vpop.f32.mrf.mxu0
    %663 = vdwg.mxu0
    %v665 = vsel %vm246, %v529, 0
    %v668 = vsel %vm533, %v240, 0
    %670 = vmatpush.bf16.msra.mxu0 0
    %671 = vmatpush.bf16.msra.mxu0 0
    %672 = vmatpush.bf16.msra.mxu0 0
    %673 = vmatpush.bf16.msra.mxu0 0
    %674 = vmatpush.bf16.msra.mxu0 0
    %675 = vmatpush.bf16.msra.mxu0 0
    %676 = vmatpush.bf16.msra.mxu0 0
    %677 = vmatpush.bf16.msra.mxu0 %v668
    %678 = vmatmul.bf16.gmra.mxu0 %v665
    %v679 = vpop.f32.mrf.mxu0
    %v680 = vadd.f32 0.0, %v679
    %v681 = vpop.f32.mrf.mxu0
    %682 = vdwg.mxu0
    %685 = vrot.lane.b32.xlu0 %v566, 8
    %v686 = vpop.permute.xlu0 %685
    %687 = vrot.lane.b32.xlu0 %v642, 8
    %v688 = vpop.permute.xlu0 %687
    %693 = vrot.lane.b32.xlu0 %v585, 16
    %v694 = vpop.permute.xlu0 %693
    %695 = vrot.lane.b32.xlu0 %v661, 16
    %v696 = vpop.permute.xlu0 %695
    %701 = vrot.lane.b32.xlu0 %v604, 24
    %v702 = vpop.permute.xlu0 %701
    %703 = vrot.lane.b32.xlu0 %v680, 24
    %v704 = vpop.permute.xlu0 %703
    %v707 = vsel %vm246, %v547, %v686
    %v708 = vsel %vm246, %v623, %v688
    %vm709 = vcmask 130048
    %v710 = vsel %vm709, %v707, %v694
    %v711 = vsel %vm709, %v708, %v696
    %vm712 = vcmask 195584
    %v713 = vsel %vm712, %v710, %v702
    %v714 = vsel %vm712, %v711, %v704
    %v715 = vpack.c.bf16 %v714, %v713
    %716 = vrot.lane.b32.xlu0 %v87, 96
    %v717 = vpop.permute.xlu0 %716
    %718 = vrot.lane.b32.xlu0 %v89, 96
    %v719 = vpop.permute.xlu0 %718
    %v723 = vsel %vm33, %v715, 0
    %725 = vmatpush.bf16.msra.mxu0 0
    %726 = vmatpush.bf16.msra.mxu0 0
    %727 = vmatpush.bf16.msra.mxu0 0
    %728 = vmatpush.bf16.msra.mxu0 0
    %729 = vmatpush.bf16.msra.mxu0 0
    %730 = vmatpush.bf16.msra.mxu0 0
    %731 = vmatpush.bf16.msra.mxu0 %v719
    %732 = vmatpush.bf16.msra.mxu0 %v717
    %733 = vmatmul.bf16.gmra.mxu0 %v723
    %v734 = vpop.f32.mrf.mxu0
    %v735 = vadd.f32 %v23, %v734
    %v736 = vpop.f32.mrf.mxu0
    %v737 = vadd.f32 %v24, %v736
    %738 = vdwg.mxu0
    %v739 = vmul.f32 %v735, %v735
    %v740 = vmul.f32 %v737, %v737
    %v741 = vsel %vm33, %v739, 0.0
    %742 = vadd.xlane.f32.xlu0 %v741
    %v743 = vpop.xlane.xlu0 %742
    %v744 = vsel %vm33, %v740, 0.0
    %745 = vadd.xlane.f32.xlu0 %v744
    %v746 = vpop.xlane.xlu0 %745
    %v747 = vmul.f32 %v743, %v46
    %v748 = vmul.f32 %v746, %v46
    %v749 = vadd.f32 %v747, 1e-06
    %v750 = vadd.f32 %v748, 1e-06
    %v751 = vrsqrt.pop %v749
    %v752 = vmul.f32 %v751, %v749
    %v753 = vmul.f32 %v752, %v751
    %v754 = vmul.f32 0.5, %v753
    %v755 = vsub.f32 1.5, %v754
    %v756 = vmul.f32 %v751, %v755
    %vm757 = vweird.f32 %v749
    %vm758 = vweird.f32 %v751
    %vm759 = vmor %vm757, %vm758
    %v760 = vsel %vm759, %v751, %v756
    %v761 = vrsqrt.pop %v750
    %v762 = vmul.f32 %v761, %v750
    %v763 = vmul.f32 %v762, %v761
    %v764 = vmul.f32 0.5, %v763
    %v765 = vsub.f32 1.5, %v764
    %v766 = vmul.f32 %v761, %v765
    %vm767 = vweird.f32 %v750
    %vm768 = vweird.f32 %v761
    %vm769 = vmor %vm767, %vm768
    %v770 = vsel %vm769, %v761, %v766
    %v771 = vmul.f32 %v735, %v760
    %v772 = vmul.f32 %v737, %v770
    %v773 = vpack.c.bf16 %v772, %v771
    %v774 = vld [vmem:[%s3] sm:$0xff]
    %v775 = vld [vmem:[%s3 + $0x8] sm:$0xff]
    %v776 = vld [vmem:[%s3 + $0x10] sm:$0xff]
    %v777 = vld [vmem:[%s3 + $0x18] sm:$0xff]
    %v778 = vld [vmem:[%s3 + $0x20] sm:$0xff]
    %v779 = vld [vmem:[%s3 + $0x28] sm:$0xff]
    %v780 = vld [vmem:[%s3 + $0x30] sm:$0xff]
    %v781 = vld [vmem:[%s3 + $0x38] sm:$0xff]
    %v790 = vunpack.c.l.b16 %v774
    %v791 = vunpack.c.h.b16 %v774
    %v792 = vunpack.c.l.b16 %v775
    %v793 = vunpack.c.h.b16 %v775
    %v794 = vunpack.c.l.b16 %v776
    %v795 = vunpack.c.h.b16 %v776
    %v796 = vunpack.c.l.b16 %v777
    %v797 = vunpack.c.h.b16 %v777
    %v798 = vunpack.c.l.b16 %v778
    %v799 = vunpack.c.h.b16 %v778
    %v800 = vunpack.c.l.b16 %v779
    %v801 = vunpack.c.h.b16 %v779
    %v802 = vunpack.c.l.b16 %v780
    %v803 = vunpack.c.h.b16 %v780
    %v804 = vunpack.c.l.b16 %v781
    %v805 = vunpack.c.h.b16 %v781
    %v806 = vpack.c.b16 %v794, %v790
    %v807 = vpack.c.b16 %v795, %v791
    %v808 = vpack.c.b16 %v796, %v792
    %v809 = vpack.c.b16 %v797, %v793
    %v810 = vpack.c.b16 %v802, %v798
    %v811 = vpack.c.b16 %v803, %v799
    %v812 = vpack.c.b16 %v804, %v800
    %v813 = vpack.c.b16 %v805, %v801
    %v823 = vsel %vm33, %v773, 0
    %825 = vmatpush.bf16.msra.mxu0 0
    %826 = vmatpush.bf16.msra.mxu0 0
    %827 = vmatpush.bf16.msra.mxu0 0
    %828 = vmatpush.bf16.msra.mxu0 0
    %829 = vmatpush.bf16.msra.mxu0 0
    %830 = vmatpush.bf16.msra.mxu0 0
    %831 = vmatpush.bf16.msra.mxu0 %v810
    %832 = vmatpush.bf16.msra.mxu0 %v806
    %833 = vmatmul.bf16.gmra.mxu0 %v823
    %v834 = vpop.f32.mrf.mxu0
    %v835 = vadd.f32 0.0, %v834
    %v836 = vpop.f32.mrf.mxu0
    %v837 = vadd.f32 0.0, %v836
    %838 = vdwg.mxu0
    %839 = vmatpush.bf16.msra.mxu0 0
    %840 = vmatpush.bf16.msra.mxu0 0
    %841 = vmatpush.bf16.msra.mxu0 0
    %842 = vmatpush.bf16.msra.mxu0 0
    %843 = vmatpush.bf16.msra.mxu0 0
    %844 = vmatpush.bf16.msra.mxu0 0
    %845 = vmatpush.bf16.msra.mxu0 %v811
    %846 = vmatpush.bf16.msra.mxu0 %v807
    %847 = vmatmul.bf16.gmra.mxu0 %v823
    %v848 = vpop.f32.mrf.mxu0
    %v849 = vadd.f32 0.0, %v848
    %v850 = vpop.f32.mrf.mxu0
    %v851 = vadd.f32 0.0, %v850
    %852 = vdwg.mxu0
    %853 = vmatpush.bf16.msra.mxu0 0
    %854 = vmatpush.bf16.msra.mxu0 0
    %855 = vmatpush.bf16.msra.mxu0 0
    %856 = vmatpush.bf16.msra.mxu0 0
    %857 = vmatpush.bf16.msra.mxu0 0
    %858 = vmatpush.bf16.msra.mxu0 0
    %859 = vmatpush.bf16.msra.mxu0 %v812
    %860 = vmatpush.bf16.msra.mxu0 %v808
    %861 = vmatmul.bf16.gmra.mxu0 %v823
    %v862 = vpop.f32.mrf.mxu0
    %v863 = vadd.f32 0.0, %v862
    %v864 = vpop.f32.mrf.mxu0
    %v865 = vadd.f32 0.0, %v864
    %866 = vdwg.mxu0
    %867 = vmatpush.bf16.msra.mxu0 0
    %868 = vmatpush.bf16.msra.mxu0 0
    %869 = vmatpush.bf16.msra.mxu0 0
    %870 = vmatpush.bf16.msra.mxu0 0
    %871 = vmatpush.bf16.msra.mxu0 0
    %872 = vmatpush.bf16.msra.mxu0 0
    %873 = vmatpush.bf16.msra.mxu0 %v813
    %874 = vmatpush.bf16.msra.mxu0 %v809
    %875 = vmatmul.bf16.gmra.mxu0 %v823
    %v876 = vpop.f32.mrf.mxu0
    %v877 = vadd.f32 0.0, %v876
    %v878 = vpop.f32.mrf.mxu0
    %v879 = vadd.f32 0.0, %v878
    %880 = vdwg.mxu0
    %v881 = vpack.c.bf16 %v849, %v835
    %v882 = vpack.c.bf16 %v877, %v863
    %v883 = vpack.c.bf16 %v851, %v837
    %v884 = vpack.c.bf16 %v879, %v865
    %v885 = vxor.u32 %v881, 2147516416
    %v886 = vxor.u32 %v883, 2147516416
    %v887 = vunpack.c.l.bf16 %v885
    %v888 = vunpack.c.h.bf16 %v885
    %v889 = vunpack.c.l.bf16 %v886
    %v890 = vunpack.c.h.bf16 %v886
    %v891 = vmul.f32 %v887, 1.442695
    %v892 = vpow.pop %v891
    %v893 = vmul.f32 %v888, 1.442695
    %v894 = vpow.pop %v893
    %v895 = vmul.f32 %v889, 1.442695
    %v896 = vpow.pop %v895
    %v897 = vmul.f32 %v890, 1.442695
    %v898 = vpow.pop %v897
    %v899 = vpack.c.bf16 %v894, %v892
    %v900 = vpack.c.bf16 %v898, %v896
    %v901 = vunpack.c.l.bf16 %v899
    %v902 = vunpack.c.h.bf16 %v899
    %v903 = vunpack.c.l.bf16 %v900
    %v904 = vunpack.c.h.bf16 %v900
    %v905 = vadd.f32 %v901, 1.0
    %v906 = vadd.f32 %v902, 1.0
    %v907 = vadd.f32 %v903, 1.0
    %v908 = vadd.f32 %v904, 1.0
    %v909 = vpack.c.bf16 %v906, %v905
    %v910 = vpack.c.bf16 %v908, %v907
    %v911 = vunpack.c.h.bf16 1065369472
    %v912 = vunpack.c.l.bf16 1065369472
    %v913 = vunpack.c.h.bf16 %v909
    %v914 = vunpack.c.l.bf16 %v909
    %v915 = vrcp.pop %v913
    %v916 = vmul.f32 %v911, %v915
    %v917 = vrcp.pop %v914
    %v918 = vmul.f32 %v912, %v917
    %v919 = vpack.c.bf16 %v916, %v918
    %v920 = vunpack.c.h.bf16 %v910
    %v921 = vunpack.c.l.bf16 %v910
    %v922 = vrcp.pop %v920
    %v923 = vmul.f32 %v911, %v922
    %v924 = vrcp.pop %v921
    %v925 = vmul.f32 %v912, %v924
    %v926 = vpack.c.bf16 %v923, %v925
    %v927 = vunpack.c.l.bf16 %v881
    %v928 = vunpack.c.h.bf16 %v881
    %v929 = vunpack.c.l.bf16 %v883
    %v930 = vunpack.c.h.bf16 %v883
    %v931 = vunpack.c.l.bf16 %v919
    %v932 = vunpack.c.h.bf16 %v919
    %v933 = vunpack.c.l.bf16 %v926
    %v934 = vunpack.c.h.bf16 %v926
    %v935 = vmul.f32 %v927, %v931
    %v936 = vmul.f32 %v928, %v932
    %v937 = vmul.f32 %v929, %v933
    %v938 = vmul.f32 %v930, %v934
    %v939 = vpack.c.bf16 %v936, %v935
    %v940 = vpack.c.bf16 %v938, %v937
    %v941 = vunpack.c.l.bf16 %v939
    %v942 = vunpack.c.h.bf16 %v939
    %v943 = vunpack.c.l.bf16 %v940
    %v944 = vunpack.c.h.bf16 %v940
    %v945 = vunpack.c.l.bf16 %v882
    %v946 = vunpack.c.h.bf16 %v882
    %v947 = vunpack.c.l.bf16 %v884
    %v948 = vunpack.c.h.bf16 %v884
    %v949 = vmul.f32 %v941, %v945
    %v950 = vmul.f32 %v942, %v946
    %v951 = vmul.f32 %v943, %v947
    %v952 = vmul.f32 %v944, %v948
    %v953 = vpack.c.bf16 %v951, %v949
    %v954 = vpack.c.bf16 %v952, %v950
    %v955 = vld [vmem:[%s4] sm:$0xf]
    %v956 = vld [vmem:[%s4 + $0x4] sm:$0xf]
    %v957 = vld [vmem:[%s4 + $0x8] sm:$0xf]
    %v958 = vld [vmem:[%s4 + $0xc] sm:$0xf]
    %v959 = vld [vmem:[%s4 + $0x10] sm:$0xf]
    %v960 = vld [vmem:[%s4 + $0x14] sm:$0xf]
    %v961 = vld [vmem:[%s4 + $0x18] sm:$0xf]
    %v962 = vld [vmem:[%s4 + $0x1c] sm:$0xf]
    %v963 = vld [vmem:[%s4 + $0x20] sm:$0xf]
    %v964 = vld [vmem:[%s4 + $0x24] sm:$0xf]
    %v965 = vld [vmem:[%s4 + $0x28] sm:$0xf]
    %v966 = vld [vmem:[%s4 + $0x2c] sm:$0xf]
    %v967 = vld [vmem:[%s4 + $0x30] sm:$0xf]
    %v968 = vld [vmem:[%s4 + $0x34] sm:$0xf]
    %v969 = vld [vmem:[%s4 + $0x38] sm:$0xf]
    %v970 = vld [vmem:[%s4 + $0x3c] sm:$0xf]
    %v971 = vld [vmem:[%s4 + $0x40] sm:$0xf]
    %v972 = vld [vmem:[%s4 + $0x44] sm:$0xf]
    %v973 = vld [vmem:[%s4 + $0x48] sm:$0xf]
    %v974 = vld [vmem:[%s4 + $0x4c] sm:$0xf]
    %v975 = vld [vmem:[%s4 + $0x50] sm:$0xf]
    %v976 = vld [vmem:[%s4 + $0x54] sm:$0xf]
    %v977 = vld [vmem:[%s4 + $0x58] sm:$0xf]
    %v978 = vld [vmem:[%s4 + $0x5c] sm:$0xf]
    %v979 = vld [vmem:[%s4 + $0x60] sm:$0xf]
    %v980 = vld [vmem:[%s4 + $0x64] sm:$0xf]
    %v981 = vld [vmem:[%s4 + $0x68] sm:$0xf]
    %v982 = vld [vmem:[%s4 + $0x6c] sm:$0xf]
    %v983 = vld [vmem:[%s4 + $0x70] sm:$0xf]
    %v984 = vld [vmem:[%s4 + $0x74] sm:$0xf]
    %v985 = vld [vmem:[%s4 + $0x78] sm:$0xf]
    %v986 = vld [vmem:[%s4 + $0x7c] sm:$0xf]
    %v1019 = vunpack.c.l.b16 %v955
    %v1020 = vunpack.c.l.b16 %v956
    %v1021 = vunpack.c.l.b16 %v957
    %v1022 = vunpack.c.l.b16 %v958
    %v1023 = vunpack.c.l.b16 %v959
    %v1024 = vunpack.c.l.b16 %v960
    %v1025 = vunpack.c.l.b16 %v961
    %v1026 = vunpack.c.l.b16 %v962
    %v1027 = vunpack.c.l.b16 %v963
    %v1028 = vunpack.c.l.b16 %v964
    %v1029 = vunpack.c.l.b16 %v965
    %v1030 = vunpack.c.l.b16 %v966
    %v1031 = vunpack.c.l.b16 %v967
    %v1032 = vunpack.c.l.b16 %v968
    %v1033 = vunpack.c.l.b16 %v969
    %v1034 = vunpack.c.l.b16 %v970
    %v1035 = vunpack.c.l.b16 %v971
    %v1036 = vunpack.c.l.b16 %v972
    %v1037 = vunpack.c.l.b16 %v973
    %v1038 = vunpack.c.l.b16 %v974
    %v1039 = vunpack.c.l.b16 %v975
    %v1040 = vunpack.c.l.b16 %v976
    %v1041 = vunpack.c.l.b16 %v977
    %v1042 = vunpack.c.l.b16 %v978
    %v1043 = vunpack.c.l.b16 %v979
    %v1044 = vunpack.c.l.b16 %v980
    %v1045 = vunpack.c.l.b16 %v981
    %v1046 = vunpack.c.l.b16 %v982
    %v1047 = vunpack.c.l.b16 %v983
    %v1048 = vunpack.c.l.b16 %v984
    %v1049 = vunpack.c.l.b16 %v985
    %v1050 = vunpack.c.l.b16 %v986
    %v1051 = vpack.c.b16 %v1020, %v1019
    %v1052 = vpack.c.b16 %v1022, %v1021
    %v1053 = vpack.c.b16 %v1024, %v1023
    %v1054 = vpack.c.b16 %v1026, %v1025
    %v1055 = vpack.c.b16 %v1028, %v1027
    %v1056 = vpack.c.b16 %v1030, %v1029
    %v1057 = vpack.c.b16 %v1032, %v1031
    %v1058 = vpack.c.b16 %v1034, %v1033
    %v1059 = vpack.c.b16 %v1036, %v1035
    %v1060 = vpack.c.b16 %v1038, %v1037
    %v1061 = vpack.c.b16 %v1040, %v1039
    %v1062 = vpack.c.b16 %v1042, %v1041
    %v1063 = vpack.c.b16 %v1044, %v1043
    %v1064 = vpack.c.b16 %v1046, %v1045
    %v1065 = vpack.c.b16 %v1048, %v1047
    %v1066 = vpack.c.b16 %v1050, %v1049
    %1083 = vmatpush.bf16.msra.mxu0 %v1058
    %1084 = vmatpush.bf16.msra.mxu0 %v1057
    %1085 = vmatpush.bf16.msra.mxu0 %v1056
    %1086 = vmatpush.bf16.msra.mxu0 %v1055
    %1087 = vmatpush.bf16.msra.mxu0 %v1054
    %1088 = vmatpush.bf16.msra.mxu0 %v1053
    %1089 = vmatpush.bf16.msra.mxu0 %v1052
    %1090 = vmatpush.bf16.msra.mxu0 %v1051
    %1091 = vmatmul.bf16.gmra.mxu0 %v953
    %v1092 = vpop.f32.mrf.mxu0
    %v1093 = vadd.f32 %v735, %v1092
    %v1094 = vpop.f32.mrf.mxu0
    %v1095 = vadd.f32 %v737, %v1094
    %1096 = vdwg.mxu0
    %1097 = vmatpush.bf16.msra.mxu0 %v1066
    %1098 = vmatpush.bf16.msra.mxu0 %v1065
    %1099 = vmatpush.bf16.msra.mxu0 %v1064
    %1100 = vmatpush.bf16.msra.mxu0 %v1063
    %1101 = vmatpush.bf16.msra.mxu0 %v1062
    %1102 = vmatpush.bf16.msra.mxu0 %v1061
    %1103 = vmatpush.bf16.msra.mxu0 %v1060
    %1104 = vmatpush.bf16.msra.mxu0 %v1059
    %1105 = vmatmul.bf16.gmra.mxu0 %v954
    %v1106 = vpop.f32.mrf.mxu0
    %v1107 = vadd.f32 %v1093, %v1106
    %v1108 = vpop.f32.mrf.mxu0
    %v1109 = vadd.f32 %v1095, %v1108
    %1110 = vdwg.mxu0
    %1111 = vst.msk [vmem:[#allocation2] sm:$0xff] %vm33, %v1107
    %1112 = vst.msk [vmem:[#allocation2 + $0x8] sm:$0xff] %vm33, %v1109
    // Predicated region
    $region22: #{tpu_custom_call.1} parent=1 // pred_check
      _
    $region23: #{tpu_custom_call.1} parent=1 // pred_check_branch
      %1114 = sbr.rel (0) target = $region25
    $region24: #{tpu_custom_call.1} parent=1 // pred_region
      %1116 = vsyncadd [#allocation3], 0
      %s1117 = sshll.u32 [#allocation2], 4
      %s1118 = int_to_ptr.vmem [resolvable:$true] %s1117
      %s1119 = sshll.u32 %s5, 4
      %s1120 = int_to_ptr.hbm [resolvable:$true] %s1119
      %1125 = dma.vmem_to_hbm [thread:$0]  %s1118, 256, %s1120, [#allocation3], 128, 128, 8
    $region25: #{tpu_custom_call.1} parent=1 // pred_fallthru
      _
    // Predicated region
    $region26: #{tpu_custom_call.1} parent=1 // pred_check
      _
    $region27: #{tpu_custom_call.1} parent=1 // pred_check_branch
      %1127 = sbr.rel (0) target = $region29
    $region28: #{tpu_custom_call.1} parent=1 // pred_region
      %1129 = dma.done [#allocation3], 256
    $region29: #{tpu_custom_call.1} parent=1 // pred_fallthru
      _
    %1130 = vsyncpa [#allocation3], 1

</llo_original>
